<compile_context>
chip_gen: v7x
topology: tpu7x:2x2x1
jax: 0.10.0
libtpu: 0.0.40
codegen_flags: <defaults>
</compile_context>

<pallas_src>
import functools

import jax
import jax.numpy as jnp
from jax.experimental import pallas as pl
from jax.experimental.pallas import tpu as pltpu
import numpy as np


def _round_up(x, m):
    return ((x + m - 1) // m) * m


# ----------------------------- Pallas kernel --------------------------------
def mmodel_kernel(x_ref,        # (T, BT, Dp) bf16  time-major RNN input (lane-padded)
                  lens_ref,     # (BT, 1)     i32   valid lengths (= input_lens - 1)
                  w_ih_ref,     # (Dp, Hp)    bf16  RNN input->hidden weight (transposed, padded)
                  w_hh_ref,     # (Hp, Hp)    f32   RNN hidden->hidden weight (transposed, padded)
                  b_ref,        # (1, Hp)     f32   b_ih + b_hh (padded with 0)
                  w_fc_ref,     # (Hp, Rp)    bf16  fc weight (transposed, padded)
                  b_fc_ref,     # (1, Rp)     f32   fc bias (padded with -1e30)
                  out_ref,      # (BT, Rp)    f32   log-softmax output
                  *, T, BT):
    Dp = x_ref.shape[-1]
    Hp = w_hh_ref.shape[1]

    # Hoisted, time-independent input projection: ONE (T*BT, Dp) x (Dp, Hp)
    # bf16 GEMM with f32 accumulation, instead of T tiny per-step GEMMs.
    # The reshape only merges major dims (sublane/lane layout unchanged -> free).
    x2d = x_ref[...].reshape(T * BT, Dp)
    xw = jnp.dot(x2d, w_ih_ref[...],
                 preferred_element_type=jnp.float32) + b_ref[...]     # (T*BT, Hp) f32

    w_hh = w_hh_ref[...]          # f32: recurrence kept full precision (tolerance)
    lens = lens_ref[...]          # (BT, 1) int32

    # Serial ReLU recurrence, statically unrolled (T is small and compile-time
    # fixed).  Only h @ W_hh stays on the dependency chain; the length-mask
    # compare/select is VPU filler the scheduler overlaps with the MXU work.
    # Follow-up: weight-stationary MXU driving (pltpu.matmul_push_rhs /
    # matmul_acc_lhs / matmul_pop) would hold the 128x128 W_hh in the MXU across
    # all T steps and remove T-1 RHS pushes from the latency chain.
    # For large T, switch to a scratch-backed lax.fori_loop so all T xw slices
    # do not remain live as vregs.
    h = jnp.zeros((BT, Hp), jnp.float32)
    for t in range(T):
        pre = xw[t * BT:(t + 1) * BT, :] + jnp.dot(
            h, w_hh, preferred_element_type=jnp.float32)
        # pack_padded_sequence semantics: freeze h once a sequence is exhausted.
        h = jnp.where(t < lens, jnp.maximum(pre, 0.0), h)

    # fc (bf16 weights, f32 acc) + numerically stable log_softmax on lane-dense
    # (8, 128) tiles.  Padded logit lanes carry -1e30 bias -> exp() underflows
    # to 0, so the real lanes' log-softmax is exact.
    logits = jnp.dot(h.astype(jnp.bfloat16), w_fc_ref[...],
                     preferred_element_type=jnp.float32) + b_fc_ref[...]
    m = jnp.max(logits, axis=1, keepdims=True)
    z = logits - m
    out_ref[...] = z - jnp.log(jnp.sum(jnp.exp(z), axis=1, keepdims=True))


# ------------------ one-time weight packing (hoisted from the call path) -----
def pack_weights(params):
    """Pad / transpose / cast the static weights ONCE (not per forward call)."""
    H = params["rnn_w_hh_l0"].shape[0]
    D = params["rnn_w_ih_l0"].shape[1]
    R = params["fc_w"].shape[0]
    Dp = _round_up(max(D, 128), 128)
    Hp = _round_up(max(H, 128), 128)   # NOTE: use 256-multiples on v6e/v7x if H grows past 128
    Rp = _round_up(max(R, 128), 128)

    w_ih_p = jnp.zeros((Dp, Hp), jnp.bfloat16).at[:D, :H].set(
        params["rnn_w_ih_l0"].T.astype(jnp.bfloat16))
    w_hh_p = jnp.zeros((Hp, Hp), jnp.float32).at[:H, :H].set(params["rnn_w_hh_l0"].T)
    b_p = jnp.zeros((1, Hp), jnp.float32).at[:, :H].set(
        (params["rnn_b_ih_l0"] + params["rnn_b_hh_l0"])[None, :])
    w_fc_p = jnp.zeros((Hp, Rp), jnp.bfloat16).at[:H, :R].set(
        params["fc_w"].T.astype(jnp.bfloat16))
    b_fc_p = jnp.full((1, Rp), -1e30, jnp.float32).at[:, :R].set(params["fc_b"][None, :])

    return dict(w_ih=w_ih_p, w_hh=w_hh_p, b=b_p, w_fc=w_fc_p, b_fc=b_fc_p,
                D=D, H=H, R=R, Dp=Dp, Hp=Hp, Rp=Rp)


# ------------------------------ forward (JAX glue + kernel) ------------------
def mmodel_forward(params, packed, ex_ix, cat_ix, lcat_ix, input_ix_padded, input_lens):
    """Embedding gathers (glue) + Pallas RNN / fc / log_softmax kernel."""
    B, T_full = ex_ix.shape
    T = T_full - 1
    D, R = packed["D"], packed["R"]
    Dp, Hp, Rp = packed["Dp"], packed["Hp"], packed["Rp"]

    # Batch tiling: pad to sublane-aligned Bp and pick a batch tile BT so the
    # grid can shard across v7x's two TensorCores when B grows.
    if B <= 256:
        BT = _round_up(max(B, 8), 8)
        Bp = BT
    else:
        BT = 256
        Bp = _round_up(B, 256)

    # Gather embeddings directly time-major (transpose the tiny int32 index
    # arrays, not the big activation tensor) and write them into a lane-dense
    # padded (T, Bp, Dp) bf16 buffer in one update.
    ex_e = params["ex_embeds"][ex_ix[:, 1:].T]          # (T, B, ex)
    cat_e = params["cat_embeds"][cat_ix[:, 1:].T]        # (T, B, cat)
    lcat_e = params["lcat_embeds"][lcat_ix[:, 1:].T]     # (T, B, lcat)
    ch_e = params["char_embeds"][input_ix_padded[:, 1:].T]  # (T, B, char)
    x = jnp.concatenate((ex_e, cat_e, lcat_e, ch_e), axis=2).astype(jnp.bfloat16)
    x_p = jnp.zeros((T, Bp, Dp), jnp.bfloat16).at[:, :B, :D].set(x)

    # Padded batch rows get length 0 -> their hidden state is never updated.
    lens_p = jnp.zeros((Bp, 1), jnp.int32).at[:B, 0].set(
        (input_lens - 1).astype(jnp.int32))

    grid = (Bp // BT,)
    flops = 2 * T * Bp * Dp * Hp + 2 * T * Bp * Hp * Hp + 2 * Bp * Hp * Rp
    transcendentals = Bp * Rp + Bp
    bytes_accessed = (x_p.size * 2 + lens_p.size * 4
                      + packed["w_ih"].size * 2 + packed["w_hh"].size * 4
                      + packed["b"].size * 4 + packed["w_fc"].size * 2
                      + packed["b_fc"].size * 4 + Bp * Rp * 4)

    out_p = pl.pallas_call(
        functools.partial(mmodel_kernel, T=T, BT=BT),
        out_shape=jax.ShapeDtypeStruct((Bp, Rp), jnp.float32),
        grid=grid,
        in_specs=[
            pl.BlockSpec((T, BT, Dp), lambda i: (0, i, 0)),   # x (time-major)
            pl.BlockSpec((BT, 1), lambda i: (i, 0)),          # lens
            pl.BlockSpec((Dp, Hp), lambda i: (0, 0)),         # W_ih^T (bf16)
            pl.BlockSpec((Hp, Hp), lambda i: (0, 0)),         # W_hh^T (f32)
            pl.BlockSpec((1, Hp), lambda i: (0, 0)),          # b_ih + b_hh
            pl.BlockSpec((Hp, Rp), lambda i: (0, 0)),         # W_fc^T (bf16)
            pl.BlockSpec((1, Rp), lambda i: (0, 0)),          # b_fc (-1e30 padded)
        ],
        out_specs=pl.BlockSpec((BT, Rp), lambda i: (i, 0)),
        compiler_params=pltpu.CompilerParams(
            dimension_semantics=("parallel",)),
        cost_estimate=pl.CostEstimate(flops=flops,
                                      transcendentals=transcendentals,
                                      bytes_accessed=bytes_accessed),
    )(x_p, lens_p, packed["w_ih"], packed["w_hh"], packed["b"],
      packed["w_fc"], packed["b_fc"])
    return out_p[:B, :R]


# ------------------------------ pure-JAX reference ---------------------------
def mmodel_reference(params, ex_ix, cat_ix, lcat_ix, input_ix_padded, input_lens):
    """Full-f32 reference mirroring the PyTorch forward (for verification)."""
    ex_e = params["ex_embeds"][ex_ix[:, 1:]]
    cat_e = params["cat_embeds"][cat_ix[:, 1:]]
    lcat_e = params["lcat_embeds"][lcat_ix[:, 1:]]
    ch_e = params["char_embeds"][input_ix_padded[:, 1:]]
    x = jnp.concatenate((ex_e, cat_e, lcat_e, ch_e), axis=2)  # (B, T, D)
    B, T, _ = x.shape
    H = params["rnn_w_hh_l0"].shape[0]
    lens_m1 = (input_lens - 1).astype(jnp.int32)

    h = jnp.zeros((B, H), jnp.float32)
    for t in range(T):
        h_new = jnp.maximum(
            x[:, t, :] @ params["rnn_w_ih_l0"].T
            + h @ params["rnn_w_hh_l0"].T
            + params["rnn_b_ih_l0"] + params["rnn_b_hh_l0"],
            0.0)
        h = jnp.where((t < lens_m1)[:, None], h_new, h)

    logits = h @ params["fc_w"].T + params["fc_b"]
    return jax.nn.log_softmax(logits, axis=1)


# --------------------------- deterministic init -------------------------------
def init_params(key, ex_vocab, cat_vocab, lcat_vocab, char_vocab,
                ex_size, cat_size, lcat_size, char_size, hidden_dim, rule_vocab):
    ks = jax.random.split(key, 10)
    D = ex_size + cat_size + lcat_size + char_size
    s = 1.0 / np.sqrt(hidden_dim)
    return {
        "ex_embeds": jax.random.normal(ks[0], (ex_vocab, ex_size), jnp.float32),
        "cat_embeds": jax.random.normal(ks[1], (cat_vocab, cat_size), jnp.float32),
        "lcat_embeds": jax.random.normal(ks[2], (lcat_vocab, lcat_size), jnp.float32),
        "char_embeds": jax.random.normal(ks[3], (char_vocab, char_size), jnp.float32),
        "rnn_w_ih_l0": jax.random.uniform(ks[4], (hidden_dim, D), jnp.float32, -s, s),
        "rnn_w_hh_l0": jax.random.uniform(ks[5], (hidden_dim, hidden_dim), jnp.float32, -s, s),
        "rnn_b_ih_l0": jax.random.uniform(ks[6], (hidden_dim,), jnp.float32, -s, s),
        "rnn_b_hh_l0": jax.random.uniform(ks[7], (hidden_dim,), jnp.float32, -s, s),
        "fc_w": jax.random.uniform(ks[8], (rule_vocab, hidden_dim), jnp.float32, -s, s),
        "fc_b": jax.random.uniform(ks[9], (rule_vocab,), jnp.float32, -s, s),
    }


# --------------------------------- main ---------------------------------------
if __name__ == "__main__":
    # small config
    ex_vocab, cat_vocab, lcat_vocab, char_vocab = 11, 13, 9, 17
    ex_size = cat_size = lcat_size = char_size = 8       # D = 32
    hidden_dim = 32
    rule_vocab = 16
    B, T_full = 4, 8                                      # RNN sees T_full - 1 = 7 steps max

    key = jax.random.PRNGKey(0)
    kp, k1, k2, k3, k4, k5 = jax.random.split(key, 6)

    params = init_params(kp, ex_vocab, cat_vocab, lcat_vocab, char_vocab,
                         ex_size, cat_size, lcat_size, char_size, hidden_dim, rule_vocab)
    packed = pack_weights(params)    # one-time weight pad/transpose/cast (hoisted)

    ex_ix = jax.random.randint(k1, (B, T_full), 0, ex_vocab, jnp.int32)
    cat_ix = jax.random.randint(k2, (B, T_full), 0, cat_vocab, jnp.int32)
    lcat_ix = jax.random.randint(k3, (B, T_full), 0, lcat_vocab, jnp.int32)
    input_ix_padded = jax.random.randint(k4, (B, T_full), 0, char_vocab, jnp.int32)
    # valid lengths in [2, T_full] (so RNN lengths are in [1, T_full-1]), unsorted
    input_lens = jax.random.randint(k5, (B,), 2, T_full + 1, jnp.int32)

    out = mmodel_forward(params, packed, ex_ix, cat_ix, lcat_ix, input_ix_padded, input_lens)
    out = jax.block_until_ready(out)

    ref = mmodel_reference(params, ex_ix, cat_ix, lcat_ix, input_ix_padded, input_lens)
    # Tolerance relaxed vs f32-only version because x / W_ih / W_fc run in bf16
    # (f32 accumulation); the serial W_hh recurrence is kept in f32.
    np.testing.assert_allclose(np.asarray(out), np.asarray(ref), rtol=2e-2, atol=2e-2)

    print("KERNEL_OK")
</pallas_src>

<mosaic_0001>
module attributes {stable_mosaic.version = 11 : i64} {
  func.func @mmodel_kernel(%arg0: i32, %arg1: memref<7x8x128xbf16, #tpu.memory_space<vmem>>, %arg2: memref<8x1xi32, #tpu.memory_space<vmem>>, %arg3: memref<128x128xbf16, #tpu.memory_space<vmem>>, %arg4: memref<128x128xf32, #tpu.memory_space<vmem>>, %arg5: memref<1x128xf32, #tpu.memory_space<vmem>>, %arg6: memref<128x128xbf16, #tpu.memory_space<vmem>>, %arg7: memref<1x128xf32, #tpu.memory_space<vmem>>, %arg8: memref<8x128xf32, #tpu.memory_space<vmem>>) attributes {dimension_semantics = [#tpu.dimension_semantics<parallel>], iteration_bounds = array<i64: 1>, scalar_prefetch = 0 : i64, scratch_operands = 0 : i64, tpu.core_type = #tpu.core_type<tc>, window_params = [{transform_indices = @transform_0, window_bounds = array<i64: 7, 8, 128>}, {transform_indices = @transform_1, window_bounds = array<i64: 8, 1>}, {pipeline_mode = #tpu.pipeline_mode<synchronous>, transform_indices = @transform_2, window_bounds = array<i64: 128, 128>}, {pipeline_mode = #tpu.pipeline_mode<synchronous>, transform_indices = @transform_3, window_bounds = array<i64: 128, 128>}, {pipeline_mode = #tpu.pipeline_mode<synchronous>, transform_indices = @transform_4, window_bounds = array<i64: 1, 128>}, {pipeline_mode = #tpu.pipeline_mode<synchronous>, transform_indices = @transform_5, window_bounds = array<i64: 128, 128>}, {pipeline_mode = #tpu.pipeline_mode<synchronous>, transform_indices = @transform_6, window_bounds = array<i64: 1, 128>}, {transform_indices = @transform_7, window_bounds = array<i64: 8, 128>}]} {
    %c0 = arith.constant 0 : index
    %c0_0 = arith.constant 0 : index
    %c0_1 = arith.constant 0 : index
    %0 = vector.load %arg1[%c0, %c0_0, %c0_1] : memref<7x8x128xbf16, #tpu.memory_space<vmem>>, vector<7x8x128xbf16>
    %1 = vector.shape_cast %0 : vector<7x8x128xbf16> to vector<56x128xbf16>
    %c0_2 = arith.constant 0 : index
    %c0_3 = arith.constant 0 : index
    %2 = vector.load %arg3[%c0_2, %c0_3] : memref<128x128xbf16, #tpu.memory_space<vmem>>, vector<128x128xbf16>
    %cst = arith.constant dense<0.000000e+00> : vector<56x128xf32>
    %3 = tpu.matmul %1, %2, %cst {dimension_numbers = #tpu.dot_dimension_numbers<[1], [0], [0], [1], [0, 0, 1, 1], [], []>} : vector<56x128xbf16>, vector<128x128xbf16>, vector<56x128xf32> -> vector<56x128xf32>
    %c0_4 = arith.constant 0 : index
    %c0_5 = arith.constant 0 : index
    %4 = vector.load %arg5[%c0_4, %c0_5] : memref<1x128xf32, #tpu.memory_space<vmem>>, vector<1x128xf32>
    %5 = vector.broadcast %4 : vector<1x128xf32> to vector<56x128xf32>
    %6 = arith.addf %3, %5 : vector<56x128xf32>
    %c0_6 = arith.constant 0 : index
    %c0_7 = arith.constant 0 : index
    %7 = vector.load %arg4[%c0_6, %c0_7] : memref<128x128xf32, #tpu.memory_space<vmem>>, vector<128x128xf32>
    %c0_8 = arith.constant 0 : index
    %c0_9 = arith.constant 0 : index
    %8 = vector.load %arg2[%c0_8, %c0_9] : memref<8x1xi32, #tpu.memory_space<vmem>>, vector<8x1xi32>
    %cst_10 = arith.constant 0.000000e+00 : f32
    %9 = vector.broadcast %cst_10 : f32 to vector<8x128xf32>
    %10 = vector.extract_strided_slice %6 {offsets = [0, 0], sizes = [8, 128], strides = [1, 1]} : vector<56x128xf32> to vector<8x128xf32>
    %cst_11 = arith.constant dense<0.000000e+00> : vector<8x128xf32>
    %11 = tpu.matmul %9, %7, %cst_11 {dimension_numbers = #tpu.dot_dimension_numbers<[1], [0], [0], [1], [0, 0, 1, 1], [], []>} : vector<8x128xf32>, vector<128x128xf32>, vector<8x128xf32> -> vector<8x128xf32>
    %12 = arith.addf %10, %11 : vector<8x128xf32>
    %c0_i32 = arith.constant 0 : i32
    %13 = vector.broadcast %c0_i32 : i32 to vector<8x1xi32>
    %14 = arith.cmpi sgt, %8, %13 : vector<8x1xi32>
    %cst_12 = arith.constant 0.000000e+00 : f32
    %15 = vector.broadcast %cst_12 : f32 to vector<8x128xf32>
    %16 = arith.maximumf %12, %15 : vector<8x128xf32>
    %17 = vector.shape_cast %14 : vector<8x1xi1> to vector<8x1xi1>
    %18 = vector.broadcast %17 : vector<8x1xi1> to vector<8x128xi1>
    %19 = arith.select %18, %16, %9 : vector<8x128xi1>, vector<8x128xf32>
    %20 = vector.extract_strided_slice %6 {offsets = [8, 0], sizes = [8, 128], strides = [1, 1]} : vector<56x128xf32> to vector<8x128xf32>
    %cst_13 = arith.constant dense<0.000000e+00> : vector<8x128xf32>
    %21 = tpu.matmul %19, %7, %cst_13 {dimension_numbers = #tpu.dot_dimension_numbers<[1], [0], [0], [1], [0, 0, 1, 1], [], []>} : vector<8x128xf32>, vector<128x128xf32>, vector<8x128xf32> -> vector<8x128xf32>
    %22 = arith.addf %20, %21 : vector<8x128xf32>
    %c1_i32 = arith.constant 1 : i32
    %23 = vector.broadcast %c1_i32 : i32 to vector<8x1xi32>
    %24 = arith.cmpi sgt, %8, %23 : vector<8x1xi32>
    %cst_14 = arith.constant 0.000000e+00 : f32
    %25 = vector.broadcast %cst_14 : f32 to vector<8x128xf32>
    %26 = arith.maximumf %22, %25 : vector<8x128xf32>
    %27 = vector.shape_cast %24 : vector<8x1xi1> to vector<8x1xi1>
    %28 = vector.broadcast %27 : vector<8x1xi1> to vector<8x128xi1>
    %29 = arith.select %28, %26, %19 : vector<8x128xi1>, vector<8x128xf32>
    %30 = vector.extract_strided_slice %6 {offsets = [16, 0], sizes = [8, 128], strides = [1, 1]} : vector<56x128xf32> to vector<8x128xf32>
    %cst_15 = arith.constant dense<0.000000e+00> : vector<8x128xf32>
    %31 = tpu.matmul %29, %7, %cst_15 {dimension_numbers = #tpu.dot_dimension_numbers<[1], [0], [0], [1], [0, 0, 1, 1], [], []>} : vector<8x128xf32>, vector<128x128xf32>, vector<8x128xf32> -> vector<8x128xf32>
    %32 = arith.addf %30, %31 : vector<8x128xf32>
    %c2_i32 = arith.constant 2 : i32
    %33 = vector.broadcast %c2_i32 : i32 to vector<8x1xi32>
    %34 = arith.cmpi sgt, %8, %33 : vector<8x1xi32>
    %cst_16 = arith.constant 0.000000e+00 : f32
    %35 = vector.broadcast %cst_16 : f32 to vector<8x128xf32>
    %36 = arith.maximumf %32, %35 : vector<8x128xf32>
    %37 = vector.shape_cast %34 : vector<8x1xi1> to vector<8x1xi1>
    %38 = vector.broadcast %37 : vector<8x1xi1> to vector<8x128xi1>
    %39 = arith.select %38, %36, %29 : vector<8x128xi1>, vector<8x128xf32>
    %40 = vector.extract_strided_slice %6 {offsets = [24, 0], sizes = [8, 128], strides = [1, 1]} : vector<56x128xf32> to vector<8x128xf32>
    %cst_17 = arith.constant dense<0.000000e+00> : vector<8x128xf32>
    %41 = tpu.matmul %39, %7, %cst_17 {dimension_numbers = #tpu.dot_dimension_numbers<[1], [0], [0], [1], [0, 0, 1, 1], [], []>} : vector<8x128xf32>, vector<128x128xf32>, vector<8x128xf32> -> vector<8x128xf32>
    %42 = arith.addf %40, %41 : vector<8x128xf32>
    %c3_i32 = arith.constant 3 : i32
    %43 = vector.broadcast %c3_i32 : i32 to vector<8x1xi32>
    %44 = arith.cmpi sgt, %8, %43 : vector<8x1xi32>
    %cst_18 = arith.constant 0.000000e+00 : f32
    %45 = vector.broadcast %cst_18 : f32 to vector<8x128xf32>
    %46 = arith.maximumf %42, %45 : vector<8x128xf32>
    %47 = vector.shape_cast %44 : vector<8x1xi1> to vector<8x1xi1>
    %48 = vector.broadcast %47 : vector<8x1xi1> to vector<8x128xi1>
    %49 = arith.select %48, %46, %39 : vector<8x128xi1>, vector<8x128xf32>
    %50 = vector.extract_strided_slice %6 {offsets = [32, 0], sizes = [8, 128], strides = [1, 1]} : vector<56x128xf32> to vector<8x128xf32>
    %cst_19 = arith.constant dense<0.000000e+00> : vector<8x128xf32>
    %51 = tpu.matmul %49, %7, %cst_19 {dimension_numbers = #tpu.dot_dimension_numbers<[1], [0], [0], [1], [0, 0, 1, 1], [], []>} : vector<8x128xf32>, vector<128x128xf32>, vector<8x128xf32> -> vector<8x128xf32>
    %52 = arith.addf %50, %51 : vector<8x128xf32>
    %c4_i32 = arith.constant 4 : i32
    %53 = vector.broadcast %c4_i32 : i32 to vector<8x1xi32>
    %54 = arith.cmpi sgt, %8, %53 : vector<8x1xi32>
    %cst_20 = arith.constant 0.000000e+00 : f32
    %55 = vector.broadcast %cst_20 : f32 to vector<8x128xf32>
    %56 = arith.maximumf %52, %55 : vector<8x128xf32>
    %57 = vector.shape_cast %54 : vector<8x1xi1> to vector<8x1xi1>
    %58 = vector.broadcast %57 : vector<8x1xi1> to vector<8x128xi1>
    %59 = arith.select %58, %56, %49 : vector<8x128xi1>, vector<8x128xf32>
    %60 = vector.extract_strided_slice %6 {offsets = [40, 0], sizes = [8, 128], strides = [1, 1]} : vector<56x128xf32> to vector<8x128xf32>
    %cst_21 = arith.constant dense<0.000000e+00> : vector<8x128xf32>
    %61 = tpu.matmul %59, %7, %cst_21 {dimension_numbers = #tpu.dot_dimension_numbers<[1], [0], [0], [1], [0, 0, 1, 1], [], []>} : vector<8x128xf32>, vector<128x128xf32>, vector<8x128xf32> -> vector<8x128xf32>
    %62 = arith.addf %60, %61 : vector<8x128xf32>
    %c5_i32 = arith.constant 5 : i32
    %63 = vector.broadcast %c5_i32 : i32 to vector<8x1xi32>
    %64 = arith.cmpi sgt, %8, %63 : vector<8x1xi32>
    %cst_22 = arith.constant 0.000000e+00 : f32
    %65 = vector.broadcast %cst_22 : f32 to vector<8x128xf32>
    %66 = arith.maximumf %62, %65 : vector<8x128xf32>
    %67 = vector.shape_cast %64 : vector<8x1xi1> to vector<8x1xi1>
    %68 = vector.broadcast %67 : vector<8x1xi1> to vector<8x128xi1>
    %69 = arith.select %68, %66, %59 : vector<8x128xi1>, vector<8x128xf32>
    %70 = vector.extract_strided_slice %6 {offsets = [48, 0], sizes = [8, 128], strides = [1, 1]} : vector<56x128xf32> to vector<8x128xf32>
    %cst_23 = arith.constant dense<0.000000e+00> : vector<8x128xf32>
    %71 = tpu.matmul %69, %7, %cst_23 {dimension_numbers = #tpu.dot_dimension_numbers<[1], [0], [0], [1], [0, 0, 1, 1], [], []>} : vector<8x128xf32>, vector<128x128xf32>, vector<8x128xf32> -> vector<8x128xf32>
    %72 = arith.addf %70, %71 : vector<8x128xf32>
    %c6_i32 = arith.constant 6 : i32
    %73 = vector.broadcast %c6_i32 : i32 to vector<8x1xi32>
    %74 = arith.cmpi sgt, %8, %73 : vector<8x1xi32>
    %cst_24 = arith.constant 0.000000e+00 : f32
    %75 = vector.broadcast %cst_24 : f32 to vector<8x128xf32>
    %76 = arith.maximumf %72, %75 : vector<8x128xf32>
    %77 = vector.shape_cast %74 : vector<8x1xi1> to vector<8x1xi1>
    %78 = vector.broadcast %77 : vector<8x1xi1> to vector<8x128xi1>
    %79 = arith.select %78, %76, %69 : vector<8x128xi1>, vector<8x128xf32>
    %80 = arith.truncf %79 : vector<8x128xf32> to vector<8x128xbf16>
    %c0_25 = arith.constant 0 : index
    %c0_26 = arith.constant 0 : index
    %81 = vector.load %arg6[%c0_25, %c0_26] : memref<128x128xbf16, #tpu.memory_space<vmem>>, vector<128x128xbf16>
    %cst_27 = arith.constant dense<0.000000e+00> : vector<8x128xf32>
    %82 = tpu.matmul %80, %81, %cst_27 {dimension_numbers = #tpu.dot_dimension_numbers<[1], [0], [0], [1], [0, 0, 1, 1], [], []>} : vector<8x128xbf16>, vector<128x128xbf16>, vector<8x128xf32> -> vector<8x128xf32>
    %c0_28 = arith.constant 0 : index
    %c0_29 = arith.constant 0 : index
    %83 = vector.load %arg7[%c0_28, %c0_29] : memref<1x128xf32, #tpu.memory_space<vmem>>, vector<1x128xf32>
    %84 = vector.broadcast %83 : vector<1x128xf32> to vector<8x128xf32>
    %85 = arith.addf %82, %84 : vector<8x128xf32>
    %cst_30 = arith.constant dense<0xFF800000> : vector<8xf32>
    %86 = vector.multi_reduction <maximumf>, %85, %cst_30 [1] : vector<8x128xf32> to vector<8xf32>
    %87 = vector.shape_cast %86 : vector<8xf32> to vector<8x1xf32>
    %88 = vector.broadcast %87 : vector<8x1xf32> to vector<8x128xf32>
    %89 = arith.subf %85, %88 : vector<8x128xf32>
    %90 = math.exp %89 : vector<8x128xf32>
    %cst_31 = arith.constant dense<0.000000e+00> : vector<8xf32>
    %91 = vector.multi_reduction <add>, %90, %cst_31 [1] : vector<8x128xf32> to vector<8xf32>
    %92 = vector.shape_cast %91 : vector<8xf32> to vector<8x1xf32>
    %93 = math.log %92 : vector<8x1xf32>
    %94 = vector.broadcast %93 : vector<8x1xf32> to vector<8x128xf32>
    %95 = arith.subf %89, %94 : vector<8x128xf32>
    %c0_32 = arith.constant 0 : index
    %c0_33 = arith.constant 0 : index
    %96 = vector.load %arg8[%c0_32, %c0_33] : memref<8x128xf32, #tpu.memory_space<vmem>>, vector<8x128xf32>
    tpu.vector_store %arg8[%c0_32, %c0_33], %95 {strides = array<i32>} : memref<8x128xf32, #tpu.memory_space<vmem>>, vector<8x128xf32>,
    return
  }
  func.func @transform_0(%arg0: i32) -> (i32, i32, i32) {
    %c0_i32 = arith.constant 0 : i32
    %c0_i32_0 = arith.constant 0 : i32
    %c0_i32_1 = arith.constant 0 : i32
    return %c0_i32, %arg0, %c0_i32_0 : i32, i32, i32
  }
  func.func @transform_1(%arg0: i32) -> (i32, i32) {
    %c0_i32 = arith.constant 0 : i32
    %c0_i32_0 = arith.constant 0 : i32
    return %arg0, %c0_i32 : i32, i32
  }
  func.func @transform_2(%arg0: i32) -> (i32, i32) {
    %c0_i32 = arith.constant 0 : i32
    %c0_i32_0 = arith.constant 0 : i32
    %c0_i32_1 = arith.constant 0 : i32
    return %c0_i32, %c0_i32_0 : i32, i32
  }
  func.func @transform_3(%arg0: i32) -> (i32, i32) {
    %c0_i32 = arith.constant 0 : i32
    %c0_i32_0 = arith.constant 0 : i32
    %c0_i32_1 = arith.constant 0 : i32
    return %c0_i32, %c0_i32_0 : i32, i32
  }
  func.func @transform_4(%arg0: i32) -> (i32, i32) {
    %c0_i32 = arith.constant 0 : i32
    %c0_i32_0 = arith.constant 0 : i32
    %c0_i32_1 = arith.constant 0 : i32
    return %c0_i32, %c0_i32_0 : i32, i32
  }
  func.func @transform_5(%arg0: i32) -> (i32, i32) {
    %c0_i32 = arith.constant 0 : i32
    %c0_i32_0 = arith.constant 0 : i32
    %c0_i32_1 = arith.constant 0 : i32
    return %c0_i32, %c0_i32_0 : i32, i32
  }
  func.func @transform_6(%arg0: i32) -> (i32, i32) {
    %c0_i32 = arith.constant 0 : i32
    %c0_i32_0 = arith.constant 0 : i32
    %c0_i32_1 = arith.constant 0 : i32
    return %c0_i32, %c0_i32_0 : i32, i32
  }
  func.func @transform_7(%arg0: i32) -> (i32, i32) {
    %c0_i32 = arith.constant 0 : i32
    %c0_i32_0 = arith.constant 0 : i32
    return %arg0, %c0_i32 : i32, i32
  }
}

</mosaic_0001>

<llo_original>
// kernel: tpu_custom_call.1
$region0: #{tpu_custom_call.1}
  #allocation0 [shape = 'u32[]', space=smem, size = 0x4, offset = 0x4, fixed_abs, tag = 'smem constant byte address 0x4 - core index']
  #allocation1 [shape = 'u32[144,128]{1,0:T(1,128)}', space=vmem, size = 0x12000, scoped, tag = 'internal scratch']
  %s0 = inlined_call_operand.hbm [shape: bf16[7,8,128], index: 0, kind: input, shape index: {}]
  %s1 = inlined_call_operand.vmem [shape: s32[8,1], index: 1, kind: input, shape index: {}]
  %s2 = inlined_call_operand.hbm [shape: bf16[128,128], index: 2, kind: input, shape index: {}]
  %s3 = inlined_call_operand.hbm [shape: f32[128,128], index: 3, kind: input, shape index: {}]
  %s4 = inlined_call_operand.vmem [shape: f32[1,128], index: 4, kind: input, shape index: {}]
  %s5 = inlined_call_operand.hbm [shape: bf16[128,128], index: 5, kind: input, shape index: {}]
  %s6 = inlined_call_operand.vmem [shape: f32[1,128], index: 6, kind: input, shape index: {}]
  %s7 = inlined_call_operand.hbm [shape: f32[8,128], index: 7, kind: output, shape index: {}]
  %s8 = sld [smem:[#allocation0]]
  $region54: #{tpu_custom_call.1} parent=0
    _
  %s10 = ssub.s32 1, %s8
  %s11 = scalar_select 0, %s10, %s8
  $region1: #{tpu_custom_call.1} parent=0
    #allocation2 [shape = 'u8[14336]{0}', space=vmem, size = 0x3800, scoped, tag = 'input window, operand 0, single buffered']
    #allocation3 [shape = 's32[1]{0}', space=sflag, size = 0x4, scoped, tag = 'scoped memory for tpu_custom_call.1']
    #allocation4 [shape = 's32[1]{0}', space=sflag, size = 0x4, scoped, tag = 'scoped memory for tpu_custom_call.1']
    #allocation5 [shape = 'u8[32768]{0}', space=vmem, size = 0x8000, scoped, tag = 'input window, operand 2, single buffered']
    #allocation6 [shape = 's32[1]{0}', space=sflag, size = 0x4, scoped, tag = 'scoped memory for tpu_custom_call.1']
    #allocation7 [shape = 'u8[65536]{0}', space=vmem, size = 0x10000, scoped, tag = 'input window, operand 3, single buffered']
    #allocation8 [shape = 'u8[32768]{0}', space=vmem, size = 0x8000, scoped, tag = 'input window, operand 5, single buffered']
    #allocation9 [shape = 's32[1]{0}', space=sflag, size = 0x4, scoped, tag = 'scoped memory for tpu_custom_call.1']
    #allocation10 [shape = 'u8[4096]{0}', space=vmem, size = 0x1000, scoped, tag = 'output window, operand 0, single buffered']
    %12 = vsyncpa [#allocation3], 0
    %13 = vsyncpa [#allocation6], 0
    %14 = vsyncpa [#allocation9], 0
    %15 = vsyncpa [#allocation4], 0
    // Predicated region
    $region2: #{tpu_custom_call.1} parent=1 // pred_check
      _
    $region3: #{tpu_custom_call.1} parent=1 // pred_check_branch
      %17 = sbr.rel (0) target = $region5
    $region4: #{tpu_custom_call.1} parent=1 // pred_region
      %s19 = ssub.s32 448, 448
      %20 = vsyncadd [#allocation3], %s19
      %s21 = sshll.u32 [#allocation2], 4
      %s22 = int_to_ptr.vmem [resolvable:$true] %s21
      %27 = dma.hbm_to_vmem [thread:$0]  %s0, 448, %s22, [#allocation3], 64, 64, 4
    $region5: #{tpu_custom_call.1} parent=1 // pred_fallthru
      _
    // Predicated region
    $region6: #{tpu_custom_call.1} parent=1 // pred_check
      _
    $region7: #{tpu_custom_call.1} parent=1 // pred_check_branch
      %29 = sbr.rel (0) target = $region9
    $region8: #{tpu_custom_call.1} parent=1 // pred_region
      _
    $region9: #{tpu_custom_call.1} parent=1 // pred_fallthru
      _
    // Predicated region
    $region10: #{tpu_custom_call.1} parent=1 // pred_check
      _
    $region11: #{tpu_custom_call.1} parent=1 // pred_check_branch
      %31 = sbr.rel (0) target = $region13
    $region12: #{tpu_custom_call.1} parent=1 // pred_region
      %s33 = ssub.s32 1024, 1024
      %34 = vsyncadd [#allocation6], %s33
      %s35 = sshll.u32 [#allocation5], 4
      %s36 = int_to_ptr.vmem [resolvable:$true] %s35
      %41 = dma.hbm_to_vmem [thread:$0]  %s2, 1024, %s36, [#allocation6], 64, 64, 4
    $region13: #{tpu_custom_call.1} parent=1 // pred_fallthru
      _
    // Predicated region
    $region14: #{tpu_custom_call.1} parent=1 // pred_check
      _
    $region15: #{tpu_custom_call.1} parent=1 // pred_check_branch
      %43 = sbr.rel (0) target = $region17
    $region16: #{tpu_custom_call.1} parent=1 // pred_region
      %s45 = ssub.s32 2048, 2048
      %46 = vsyncadd [#allocation6], %s45
      %s47 = sshll.u32 [#allocation7], 4
      %s48 = int_to_ptr.vmem [resolvable:$true] %s47
      %53 = dma.hbm_to_vmem [thread:$0]  %s3, 2048, %s48, [#allocation6], 128, 128, 8
    $region17: #{tpu_custom_call.1} parent=1 // pred_fallthru
      _
    // Predicated region
    $region18: #{tpu_custom_call.1} parent=1 // pred_check
      _
    $region19: #{tpu_custom_call.1} parent=1 // pred_check_branch
      %55 = sbr.rel (0) target = $region21
    $region20: #{tpu_custom_call.1} parent=1 // pred_region
      _
    $region21: #{tpu_custom_call.1} parent=1 // pred_fallthru
      _
    // Predicated region
    $region22: #{tpu_custom_call.1} parent=1 // pred_check
      _
    $region23: #{tpu_custom_call.1} parent=1 // pred_check_branch
      %57 = sbr.rel (0) target = $region25
    $region24: #{tpu_custom_call.1} parent=1 // pred_region
      %s59 = ssub.s32 1024, 1024
      %60 = vsyncadd [#allocation9], %s59
      %s61 = sshll.u32 [#allocation8], 4
      %s62 = int_to_ptr.vmem [resolvable:$true] %s61
      %67 = dma.hbm_to_vmem [thread:$0]  %s5, 1024, %s62, [#allocation9], 64, 64, 4
    $region25: #{tpu_custom_call.1} parent=1 // pred_fallthru
      _
    // Predicated region
    $region26: #{tpu_custom_call.1} parent=1 // pred_check
      _
    $region27: #{tpu_custom_call.1} parent=1 // pred_check_branch
      %69 = sbr.rel (0) target = $region29
    $region28: #{tpu_custom_call.1} parent=1 // pred_region
      _
    $region29: #{tpu_custom_call.1} parent=1 // pred_fallthru
      _
    // Predicated region
    $region30: #{tpu_custom_call.1} parent=1 // pred_check
      _
    $region31: #{tpu_custom_call.1} parent=1 // pred_check_branch
      %71 = sbr.rel (0) target = $region33
    $region32: #{tpu_custom_call.1} parent=1 // pred_region
      %72 = dma.done [#allocation3], 448
    $region33: #{tpu_custom_call.1} parent=1 // pred_fallthru
      _
    // Predicated region
    $region34: #{tpu_custom_call.1} parent=1 // pred_check
      _
    $region35: #{tpu_custom_call.1} parent=1 // pred_check_branch
      %74 = sbr.rel (0) target = $region37
    $region36: #{tpu_custom_call.1} parent=1 // pred_region
      %75 = dma.done [#allocation6], 1024
    $region37: #{tpu_custom_call.1} parent=1 // pred_fallthru
      _
    // Predicated region
    $region38: #{tpu_custom_call.1} parent=1 // pred_check
      _
    $region39: #{tpu_custom_call.1} parent=1 // pred_check_branch
      %77 = sbr.rel (0) target = $region41
    $region40: #{tpu_custom_call.1} parent=1 // pred_region
      %78 = dma.done [#allocation6], 2048
    $region41: #{tpu_custom_call.1} parent=1 // pred_fallthru
      _
    // Predicated region
    $region42: #{tpu_custom_call.1} parent=1 // pred_check
      _
    $region43: #{tpu_custom_call.1} parent=1 // pred_check_branch
      %80 = sbr.rel (0) target = $region45
    $region44: #{tpu_custom_call.1} parent=1 // pred_region
      %81 = dma.done [#allocation9], 1024
    $region45: #{tpu_custom_call.1} parent=1 // pred_fallthru
      _
    %v83 = vld [vmem:[#allocation2] sm:$0xf]
    %v84 = vld [vmem:[#allocation2 + $0x4] sm:$0xf]
    %v85 = vld [vmem:[#allocation2 + $0x8] sm:$0xf]
    %v86 = vld [vmem:[#allocation2 + $0xc] sm:$0xf]
    %v87 = vld [vmem:[#allocation2 + $0x10] sm:$0xf]
    %v88 = vld [vmem:[#allocation2 + $0x14] sm:$0xf]
    %v89 = vld [vmem:[#allocation2 + $0x18] sm:$0xf]
    %v90 = vld [vmem:[#allocation5] sm:$0xf]
    %v91 = vld [vmem:[#allocation5 + $0x4] sm:$0xf]
    %v92 = vld [vmem:[#allocation5 + $0x8] sm:$0xf]
    %v93 = vld [vmem:[#allocation5 + $0xc] sm:$0xf]
    %v94 = vld [vmem:[#allocation5 + $0x10] sm:$0xf]
    %v95 = vld [vmem:[#allocation5 + $0x14] sm:$0xf]
    %v96 = vld [vmem:[#allocation5 + $0x18] sm:$0xf]
    %v97 = vld [vmem:[#allocation5 + $0x1c] sm:$0xf]
    %v98 = vld [vmem:[#allocation5 + $0x20] sm:$0xf]
    %v99 = vld [vmem:[#allocation5 + $0x24] sm:$0xf]
    %v100 = vld [vmem:[#allocation5 + $0x28] sm:$0xf]
    %v101 = vld [vmem:[#allocation5 + $0x2c] sm:$0xf]
    %v102 = vld [vmem:[#allocation5 + $0x30] sm:$0xf]
    %v103 = vld [vmem:[#allocation5 + $0x34] sm:$0xf]
    %v104 = vld [vmem:[#allocation5 + $0x38] sm:$0xf]
    %v105 = vld [vmem:[#allocation5 + $0x3c] sm:$0xf]
    %v106 = vld [vmem:[%s4] sm:$0x1]
    %v108 = vlaneseq
    %v109 = vshrl.u32 %v108, 7
    %v110 = vsub.s32 0, %v109
    %v111 = vrot.slane %v106, %v110
    %v120 = vunpack.c.l.b16 %v83
    %v121 = vunpack.c.l.b16 %v84
    %v122 = vunpack.c.l.b16 %v85
    %v123 = vunpack.c.l.b16 %v86
    %v124 = vunpack.c.l.b16 %v87
    %v125 = vunpack.c.l.b16 %v88
    %v126 = vunpack.c.l.b16 %v89
    %v127 = vpack.c.b16 %v121, %v120
    %v128 = vpack.c.b16 %v123, %v122
    %v129 = vpack.c.b16 %v125, %v124
    %v130 = vpack.c.b16 %v126, %v126
    %v151 = vunpack.c.l.b16 %v90
    %v152 = vunpack.c.l.b16 %v91
    %v153 = vunpack.c.l.b16 %v92
    %v154 = vunpack.c.l.b16 %v93
    %v155 = vunpack.c.l.b16 %v94
    %v156 = vunpack.c.l.b16 %v95
    %v157 = vunpack.c.l.b16 %v96
    %v158 = vunpack.c.l.b16 %v97
    %v159 = vunpack.c.l.b16 %v98
    %v160 = vunpack.c.l.b16 %v99
    %v161 = vunpack.c.l.b16 %v100
    %v162 = vunpack.c.l.b16 %v101
    %v163 = vunpack.c.l.b16 %v102
    %v164 = vunpack.c.l.b16 %v103
    %v165 = vunpack.c.l.b16 %v104
    %v166 = vunpack.c.l.b16 %v105
    %v167 = vpack.c.b16 %v152, %v151
    %v168 = vpack.c.b16 %v154, %v153
    %v169 = vpack.c.b16 %v156, %v155
    %v170 = vpack.c.b16 %v158, %v157
    %v171 = vpack.c.b16 %v160, %v159
    %v172 = vpack.c.b16 %v162, %v161
    %v173 = vpack.c.b16 %v164, %v163
    %v174 = vpack.c.b16 %v166, %v165
    %183 = vmatprep.subr.bf16.mxu0 0
    %184 = vmatpush1.bf16.msra.mxu0 %v167
    %185 = vmatprep.subr.bf16.mxu0 0
    %186 = vmatpush1.bf16.msra.mxu0 %v168
    %187 = vmatprep.subr.bf16.mxu0 0
    %188 = vmatpush1.bf16.msra.mxu0 %v169
    %189 = vmatprep.subr.bf16.mxu0 0
    %190 = vmatpush1.bf16.msra.mxu0 %v170
    %191 = vmatprep.subr.bf16.mxu0 0
    %192 = vmatpush1.bf16.msra.mxu0 %v171
    %193 = vmatprep.subr.bf16.mxu0 0
    %194 = vmatpush1.bf16.msra.mxu0 %v172
    %195 = vmatprep.subr.bf16.mxu0 0
    %196 = vmatpush1.bf16.msra.mxu0 %v173
    %197 = vmatprep.subr.bf16.mxu0 0
    %198 = vmatpush1.bf16.msra.mxu0 %v174
    %199 = vmatprep.subr.bf16.mxu0 0
    %200 = vmatpush1.bf16.msra.mxu0 0
    %201 = vmatprep.subr.bf16.mxu0 0
    %202 = vmatpush1.bf16.msra.mxu0 0
    %203 = vmatprep.subr.bf16.mxu0 0
    %204 = vmatpush1.bf16.msra.mxu0 0
    %205 = vmatprep.subr.bf16.mxu0 0
    %206 = vmatpush1.bf16.msra.mxu0 0
    %207 = vmatprep.subr.bf16.mxu0 0
    %208 = vmatpush1.bf16.msra.mxu0 0
    %209 = vmatprep.subr.bf16.mxu0 0
    %210 = vmatpush1.bf16.msra.mxu0 0
    %211 = vmatprep.subr.bf16.mxu0 0
    %212 = vmatpush1.bf16.msra.mxu0 0
    %213 = vmatprep.subr.bf16.mxu0 0
    %214 = vmatpush1.bf16.msra.mxu0 0
    %215 = vmatprep.mubr.bf16.mxu0 0
    %216 = vmatmul.mubr.bf16.gmra.mrb[0].mxu0 %v127
    %v217 = vpop.f32.mrb[0].mxu0
    %v218 = vadd.f32 %v111, %v217
    %v219 = vpop.f32.mrb[0].mxu0
    %v220 = vpop.f32.mrb[0].mxu0
    %v221 = vadd.f32 %v111, %v220
    %v222 = vpop.f32.mrb[0].mxu0
    %223 = vmatprep.mubr.bf16.mxu0 0
    %224 = vmatmul.mubr.bf16.gmra.mrb[0].mxu0 %v128
    %v225 = vpop.f32.mrb[0].mxu0
    %v226 = vadd.f32 %v111, %v225
    %v227 = vpop.f32.mrb[0].mxu0
    %v228 = vpop.f32.mrb[0].mxu0
    %v229 = vadd.f32 %v111, %v228
    %v230 = vpop.f32.mrb[0].mxu0
    %231 = vmatprep.mubr.bf16.mxu0 0
    %232 = vmatmul.mubr.bf16.gmra.mrb[0].mxu0 %v129
    %v233 = vpop.f32.mrb[0].mxu0
    %v234 = vadd.f32 %v111, %v233
    %v235 = vpop.f32.mrb[0].mxu0
    %v236 = vpop.f32.mrb[0].mxu0
    %v237 = vadd.f32 %v111, %v236
    %v238 = vpop.f32.mrb[0].mxu0
    %239 = vmatprep.mubr.bf16.mxu0 0
    %240 = vmatmul.mubr.bf16.gmra.mrb[0].mxu0 %v130
    %v241 = vpop.f32.mrb[0].mxu0
    %v242 = vadd.f32 %v111, %v241
    %v243 = vpop.f32.mrb[0].mxu0
    %v244 = vpop.f32.mrb[0].mxu0
    %v245 = vpop.f32.mrb[0].mxu0
    %246 = vdwg.mxu0
    %v247 = vld [vmem:[#allocation7] sm:$0xff]
    %v248 = vld [vmem:[#allocation7 + $0x8] sm:$0xff]
    %v249 = vld [vmem:[#allocation7 + $0x10] sm:$0xff]
    %v250 = vld [vmem:[#allocation7 + $0x18] sm:$0xff]
    %v251 = vld [vmem:[#allocation7 + $0x20] sm:$0xff]
    %v252 = vld [vmem:[#allocation7 + $0x28] sm:$0xff]
    %v253 = vld [vmem:[#allocation7 + $0x30] sm:$0xff]
    %v254 = vld [vmem:[#allocation7 + $0x38] sm:$0xff]
    %v255 = vld [vmem:[#allocation7 + $0x40] sm:$0xff]
    %v256 = vld [vmem:[#allocation7 + $0x48] sm:$0xff]
    %v257 = vld [vmem:[#allocation7 + $0x50] sm:$0xff]
    %v258 = vld [vmem:[#allocation7 + $0x58] sm:$0xff]
    %v259 = vld [vmem:[#allocation7 + $0x60] sm:$0xff]
    %v260 = vld [vmem:[#allocation7 + $0x68] sm:$0xff]
    %v261 = vld [vmem:[#allocation7 + $0x70] sm:$0xff]
    %v262 = vld [vmem:[#allocation7 + $0x78] sm:$0xff]
    %v263 = vld [vmem:[%s1] sm:$0xff]
    %264 = vmatprep.subr.mxu0 0.0
    %265 = vmatpush1.msra.mxu0 %v247
    %266 = vmatprep.subr.mxu0 0.0
    %267 = vmatpush1.msra.mxu0 %v248
    %268 = vmatprep.subr.mxu0 0.0
    %269 = vmatpush1.msra.mxu0 %v249
    %270 = vmatprep.subr.mxu0 0.0
    %271 = vmatpush1.msra.mxu0 %v250
    %272 = vmatprep.subr.mxu0 0.0
    %273 = vmatpush1.msra.mxu0 %v251
    %274 = vmatprep.subr.mxu0 0.0
    %275 = vmatpush1.msra.mxu0 %v252
    %276 = vmatprep.subr.mxu0 0.0
    %277 = vmatpush1.msra.mxu0 %v253
    %278 = vmatprep.subr.mxu0 0.0
    %279 = vmatpush1.msra.mxu0 %v254
    %280 = vmatprep.subr.mxu0 0.0
    %281 = vmatpush1.msra.mxu0 %v255
    %282 = vmatprep.subr.mxu0 0.0
    %283 = vmatpush1.msra.mxu0 %v256
    %284 = vmatprep.subr.mxu0 0.0
    %285 = vmatpush1.msra.mxu0 %v257
    %286 = vmatprep.subr.mxu0 0.0
    %287 = vmatpush1.msra.mxu0 %v258
    %288 = vmatprep.subr.mxu0 0.0
    %289 = vmatpush1.msra.mxu0 %v259
    %290 = vmatprep.subr.mxu0 0.0
    %291 = vmatpush1.msra.mxu0 %v260
    %292 = vmatprep.subr.mxu0 0.0
    %293 = vmatpush1.msra.mxu0 %v261
    %294 = vmatprep.subr.mxu0 0.0
    %295 = vmatpush1.msra.mxu0 %v262
    %296 = vmatprep.subr.mxu0 0.0
    %297 = vmatpush1.msra.mxu0 0.0
    %298 = vmatprep.subr.mxu0 0.0
    %299 = vmatpush1.msra.mxu0 0.0
    %300 = vmatprep.subr.mxu0 0.0
    %301 = vmatpush1.msra.mxu0 0.0
    %302 = vmatprep.subr.mxu0 0.0
    %303 = vmatpush1.msra.mxu0 0.0
    %304 = vmatprep.subr.mxu0 0.0
    %305 = vmatpush1.msra.mxu0 0.0
    %306 = vmatprep.subr.mxu0 0.0
    %307 = vmatpush1.msra.mxu0 0.0
    %308 = vmatprep.subr.mxu0 0.0
    %309 = vmatpush1.msra.mxu0 0.0
    %310 = vmatprep.subr.mxu0 0.0
    %311 = vmatpush1.msra.mxu0 0.0
    %312 = vmatprep.subr.mxu0 0.0
    %313 = vmatpush1.msra.mxu0 0.0
    %314 = vmatprep.subr.mxu0 0.0
    %315 = vmatpush1.msra.mxu0 0.0
    %316 = vmatprep.subr.mxu0 0.0
    %317 = vmatpush1.msra.mxu0 0.0
    %318 = vmatprep.subr.mxu0 0.0
    %319 = vmatpush1.msra.mxu0 0.0
    %320 = vmatprep.subr.mxu0 0.0
    %321 = vmatpush1.msra.mxu0 0.0
    %322 = vmatprep.subr.mxu0 0.0
    %323 = vmatpush1.msra.mxu0 0.0
    %324 = vmatprep.subr.mxu0 0.0
    %325 = vmatpush1.msra.mxu0 0.0
    %326 = vmatprep.subr.mxu0 0.0
    %327 = vmatpush1.msra.mxu0 0.0
    %328 = vmatprep.mubr.f32.mxu0 0.0
    %329 = vmatmul.mubr.f32.gmra.mrb[0].mxu0 0.0
    %v330 = vpop.f32.mrb[0].mxu0
    %v331 = vadd.f32 0.0, %v330
    %v332 = vpop.f32.mrb[0].mxu0
    %333 = vdwg.mxu0
    %v334 = vadd.f32 %v218, %v331
    %vm335 = vcmp.gt.s32.totalorder %v263, 0
    %v336 = vmax.f32 %v334, 0.0
    %v337 = vsel %vm335, 1, 0
    %338 = vset.pattern.permute.xlu0 0
    %339 = vperm.xlu0 %338, %v337
    %v340 = vpop.permute.xlu0 %339
    %vm341 = vcmp.eq.s32.totalorder %v340, 1
    %v342 = vsel %vm341, %v336, 0.0
    %343 = vmatprep.subr.mxu0 0.0
    %344 = vmatpush1.msra.mxu0 %v247
    %345 = vmatprep.subr.mxu0 0.0
    %346 = vmatpush1.msra.mxu0 %v248
    %347 = vmatprep.subr.mxu0 0.0
    %348 = vmatpush1.msra.mxu0 %v249
    %349 = vmatprep.subr.mxu0 0.0
    %350 = vmatpush1.msra.mxu0 %v250
    %351 = vmatprep.subr.mxu0 0.0
    %352 = vmatpush1.msra.mxu0 %v251
    %353 = vmatprep.subr.mxu0 0.0
    %354 = vmatpush1.msra.mxu0 %v252
    %355 = vmatprep.subr.mxu0 0.0
    %356 = vmatpush1.msra.mxu0 %v253
    %357 = vmatprep.subr.mxu0 0.0
    %358 = vmatpush1.msra.mxu0 %v254
    %359 = vmatprep.subr.mxu0 0.0
    %360 = vmatpush1.msra.mxu0 %v255
    %361 = vmatprep.subr.mxu0 0.0
    %362 = vmatpush1.msra.mxu0 %v256
    %363 = vmatprep.subr.mxu0 0.0
    %364 = vmatpush1.msra.mxu0 %v257
    %365 = vmatprep.subr.mxu0 0.0
    %366 = vmatpush1.msra.mxu0 %v258
    %367 = vmatprep.subr.mxu0 0.0
    %368 = vmatpush1.msra.mxu0 %v259
    %369 = vmatprep.subr.mxu0 0.0
    %370 = vmatpush1.msra.mxu0 %v260
    %371 = vmatprep.subr.mxu0 0.0
    %372 = vmatpush1.msra.mxu0 %v261
    %373 = vmatprep.subr.mxu0 0.0
    %374 = vmatpush1.msra.mxu0 %v262
    %375 = vmatprep.subr.mxu0 0.0
    %376 = vmatpush1.msra.mxu0 0.0
    %377 = vmatprep.subr.mxu0 0.0
    %378 = vmatpush1.msra.mxu0 0.0
    %379 = vmatprep.subr.mxu0 0.0
    %380 = vmatpush1.msra.mxu0 0.0
    %381 = vmatprep.subr.mxu0 0.0
    %382 = vmatpush1.msra.mxu0 0.0
    %383 = vmatprep.subr.mxu0 0.0
    %384 = vmatpush1.msra.mxu0 0.0
    %385 = vmatprep.subr.mxu0 0.0
    %386 = vmatpush1.msra.mxu0 0.0
    %387 = vmatprep.subr.mxu0 0.0
    %388 = vmatpush1.msra.mxu0 0.0
    %389 = vmatprep.subr.mxu0 0.0
    %390 = vmatpush1.msra.mxu0 0.0
    %391 = vmatprep.subr.mxu0 0.0
    %392 = vmatpush1.msra.mxu0 0.0
    %393 = vmatprep.subr.mxu0 0.0
    %394 = vmatpush1.msra.mxu0 0.0
    %395 = vmatprep.subr.mxu0 0.0
    %396 = vmatpush1.msra.mxu0 0.0
    %397 = vmatprep.subr.mxu0 0.0
    %398 = vmatpush1.msra.mxu0 0.0
    %399 = vmatprep.subr.mxu0 0.0
    %400 = vmatpush1.msra.mxu0 0.0
    %401 = vmatprep.subr.mxu0 0.0
    %402 = vmatpush1.msra.mxu0 0.0
    %403 = vmatprep.subr.mxu0 0.0
    %404 = vmatpush1.msra.mxu0 0.0
    %405 = vmatprep.subr.mxu0 0.0
    %406 = vmatpush1.msra.mxu0 0.0
    %407 = vmatprep.mubr.f32.mxu0 0.0
    %408 = vmatmul.mubr.f32.gmra.mrb[0].mxu0 %v342
    %v409 = vpop.f32.mrb[0].mxu0
    %v410 = vadd.f32 0.0, %v409
    %v411 = vpop.f32.mrb[0].mxu0
    %412 = vdwg.mxu0
    %v413 = vadd.f32 %v221, %v410
    %vm414 = vcmp.gt.s32.totalorder %v263, 1
    %v415 = vmax.f32 %v413, 0.0
    %v416 = vsel %vm414, 1, 0
    %417 = vset.pattern.permute.xlu0 0
    %418 = vperm.xlu0 %417, %v416
    %v419 = vpop.permute.xlu0 %418
    %vm420 = vcmp.eq.s32.totalorder %v419, 1
    %v421 = vsel %vm420, %v415, %v342
    %422 = vmatprep.subr.mxu0 0.0
    %423 = vmatpush1.msra.mxu0 %v247
    %424 = vmatprep.subr.mxu0 0.0
    %425 = vmatpush1.msra.mxu0 %v248
    %426 = vmatprep.subr.mxu0 0.0
    %427 = vmatpush1.msra.mxu0 %v249
    %428 = vmatprep.subr.mxu0 0.0
    %429 = vmatpush1.msra.mxu0 %v250
    %430 = vmatprep.subr.mxu0 0.0
    %431 = vmatpush1.msra.mxu0 %v251
    %432 = vmatprep.subr.mxu0 0.0
    %433 = vmatpush1.msra.mxu0 %v252
    %434 = vmatprep.subr.mxu0 0.0
    %435 = vmatpush1.msra.mxu0 %v253
    %436 = vmatprep.subr.mxu0 0.0
    %437 = vmatpush1.msra.mxu0 %v254
    %438 = vmatprep.subr.mxu0 0.0
    %439 = vmatpush1.msra.mxu0 %v255
    %440 = vmatprep.subr.mxu0 0.0
    %441 = vmatpush1.msra.mxu0 %v256
    %442 = vmatprep.subr.mxu0 0.0
    %443 = vmatpush1.msra.mxu0 %v257
    %444 = vmatprep.subr.mxu0 0.0
    %445 = vmatpush1.msra.mxu0 %v258
    %446 = vmatprep.subr.mxu0 0.0
    %447 = vmatpush1.msra.mxu0 %v259
    %448 = vmatprep.subr.mxu0 0.0
    %449 = vmatpush1.msra.mxu0 %v260
    %450 = vmatprep.subr.mxu0 0.0
    %451 = vmatpush1.msra.mxu0 %v261
    %452 = vmatprep.subr.mxu0 0.0
    %453 = vmatpush1.msra.mxu0 %v262
    %454 = vmatprep.subr.mxu0 0.0
    %455 = vmatpush1.msra.mxu0 0.0
    %456 = vmatprep.subr.mxu0 0.0
    %457 = vmatpush1.msra.mxu0 0.0
    %458 = vmatprep.subr.mxu0 0.0
    %459 = vmatpush1.msra.mxu0 0.0
    %460 = vmatprep.subr.mxu0 0.0
    %461 = vmatpush1.msra.mxu0 0.0
    %462 = vmatprep.subr.mxu0 0.0
    %463 = vmatpush1.msra.mxu0 0.0
    %464 = vmatprep.subr.mxu0 0.0
    %465 = vmatpush1.msra.mxu0 0.0
    %466 = vmatprep.subr.mxu0 0.0
    %467 = vmatpush1.msra.mxu0 0.0
    %468 = vmatprep.subr.mxu0 0.0
    %469 = vmatpush1.msra.mxu0 0.0
    %470 = vmatprep.subr.mxu0 0.0
    %471 = vmatpush1.msra.mxu0 0.0
    %472 = vmatprep.subr.mxu0 0.0
    %473 = vmatpush1.msra.mxu0 0.0
    %474 = vmatprep.subr.mxu0 0.0
    %475 = vmatpush1.msra.mxu0 0.0
    %476 = vmatprep.subr.mxu0 0.0
    %477 = vmatpush1.msra.mxu0 0.0
    %478 = vmatprep.subr.mxu0 0.0
    %479 = vmatpush1.msra.mxu0 0.0
    %480 = vmatprep.subr.mxu0 0.0
    %481 = vmatpush1.msra.mxu0 0.0
    %482 = vmatprep.subr.mxu0 0.0
    %483 = vmatpush1.msra.mxu0 0.0
    %484 = vmatprep.subr.mxu0 0.0
    %485 = vmatpush1.msra.mxu0 0.0
    %486 = vmatprep.mubr.f32.mxu0 0.0
    %487 = vmatmul.mubr.f32.gmra.mrb[0].mxu0 %v421
    %v488 = vpop.f32.mrb[0].mxu0
    %v489 = vadd.f32 0.0, %v488
    %v490 = vpop.f32.mrb[0].mxu0
    %491 = vdwg.mxu0
    %v492 = vadd.f32 %v226, %v489
    %vm493 = vcmp.gt.s32.totalorder %v263, 2
    %v494 = vmax.f32 %v492, 0.0
    %v495 = vsel %vm493, 1, 0
    %496 = vset.pattern.permute.xlu0 0
    %497 = vperm.xlu0 %496, %v495
    %v498 = vpop.permute.xlu0 %497
    %vm499 = vcmp.eq.s32.totalorder %v498, 1
    %v500 = vsel %vm499, %v494, %v421
    %501 = vmatprep.subr.mxu0 0.0
    %502 = vmatpush1.msra.mxu0 %v247
    %503 = vmatprep.subr.mxu0 0.0
    %504 = vmatpush1.msra.mxu0 %v248
    %505 = vmatprep.subr.mxu0 0.0
    %506 = vmatpush1.msra.mxu0 %v249
    %507 = vmatprep.subr.mxu0 0.0
    %508 = vmatpush1.msra.mxu0 %v250
    %509 = vmatprep.subr.mxu0 0.0
    %510 = vmatpush1.msra.mxu0 %v251
    %511 = vmatprep.subr.mxu0 0.0
    %512 = vmatpush1.msra.mxu0 %v252
    %513 = vmatprep.subr.mxu0 0.0
    %514 = vmatpush1.msra.mxu0 %v253
    %515 = vmatprep.subr.mxu0 0.0
    %516 = vmatpush1.msra.mxu0 %v254
    %517 = vmatprep.subr.mxu0 0.0
    %518 = vmatpush1.msra.mxu0 %v255
    %519 = vmatprep.subr.mxu0 0.0
    %520 = vmatpush1.msra.mxu0 %v256
    %521 = vmatprep.subr.mxu0 0.0
    %522 = vmatpush1.msra.mxu0 %v257
    %523 = vmatprep.subr.mxu0 0.0
    %524 = vmatpush1.msra.mxu0 %v258
    %525 = vmatprep.subr.mxu0 0.0
    %526 = vmatpush1.msra.mxu0 %v259
    %527 = vmatprep.subr.mxu0 0.0
    %528 = vmatpush1.msra.mxu0 %v260
    %529 = vmatprep.subr.mxu0 0.0
    %530 = vmatpush1.msra.mxu0 %v261
    %531 = vmatprep.subr.mxu0 0.0
    %532 = vmatpush1.msra.mxu0 %v262
    %533 = vmatprep.subr.mxu0 0.0
    %534 = vmatpush1.msra.mxu0 0.0
    %535 = vmatprep.subr.mxu0 0.0
    %536 = vmatpush1.msra.mxu0 0.0
    %537 = vmatprep.subr.mxu0 0.0
    %538 = vmatpush1.msra.mxu0 0.0
    %539 = vmatprep.subr.mxu0 0.0
    %540 = vmatpush1.msra.mxu0 0.0
    %541 = vmatprep.subr.mxu0 0.0
    %542 = vmatpush1.msra.mxu0 0.0
    %543 = vmatprep.subr.mxu0 0.0
    %544 = vmatpush1.msra.mxu0 0.0
    %545 = vmatprep.subr.mxu0 0.0
    %546 = vmatpush1.msra.mxu0 0.0
    %547 = vmatprep.subr.mxu0 0.0
    %548 = vmatpush1.msra.mxu0 0.0
    %549 = vmatprep.subr.mxu0 0.0
    %550 = vmatpush1.msra.mxu0 0.0
    %551 = vmatprep.subr.mxu0 0.0
    %552 = vmatpush1.msra.mxu0 0.0
    %553 = vmatprep.subr.mxu0 0.0
    %554 = vmatpush1.msra.mxu0 0.0
    %555 = vmatprep.subr.mxu0 0.0
    %556 = vmatpush1.msra.mxu0 0.0
    %557 = vmatprep.subr.mxu0 0.0
    %558 = vmatpush1.msra.mxu0 0.0
    %559 = vmatprep.subr.mxu0 0.0
    %560 = vmatpush1.msra.mxu0 0.0
    %561 = vmatprep.subr.mxu0 0.0
    %562 = vmatpush1.msra.mxu0 0.0
    %563 = vmatprep.subr.mxu0 0.0
    %564 = vmatpush1.msra.mxu0 0.0
    %565 = vmatprep.mubr.f32.mxu0 0.0
    %566 = vmatmul.mubr.f32.gmra.mrb[0].mxu0 %v500
    %v567 = vpop.f32.mrb[0].mxu0
    %v568 = vadd.f32 0.0, %v567
    %v569 = vpop.f32.mrb[0].mxu0
    %570 = vdwg.mxu0
    %v571 = vadd.f32 %v229, %v568
    %vm572 = vcmp.gt.s32.totalorder %v263, 3
    %v573 = vmax.f32 %v571, 0.0
    %v574 = vsel %vm572, 1, 0
    %575 = vset.pattern.permute.xlu0 0
    %576 = vperm.xlu0 %575, %v574
    %v577 = vpop.permute.xlu0 %576
    %vm578 = vcmp.eq.s32.totalorder %v577, 1
    %v579 = vsel %vm578, %v573, %v500
    %580 = vmatprep.subr.mxu0 0.0
    %581 = vmatpush1.msra.mxu0 %v247
    %582 = vmatprep.subr.mxu0 0.0
    %583 = vmatpush1.msra.mxu0 %v248
    %584 = vmatprep.subr.mxu0 0.0
    %585 = vmatpush1.msra.mxu0 %v249
    %586 = vmatprep.subr.mxu0 0.0
    %587 = vmatpush1.msra.mxu0 %v250
    %588 = vmatprep.subr.mxu0 0.0
    %589 = vmatpush1.msra.mxu0 %v251
    %590 = vmatprep.subr.mxu0 0.0
    %591 = vmatpush1.msra.mxu0 %v252
    %592 = vmatprep.subr.mxu0 0.0
    %593 = vmatpush1.msra.mxu0 %v253
    %594 = vmatprep.subr.mxu0 0.0
    %595 = vmatpush1.msra.mxu0 %v254
    %596 = vmatprep.subr.mxu0 0.0
    %597 = vmatpush1.msra.mxu0 %v255
    %598 = vmatprep.subr.mxu0 0.0
    %599 = vmatpush1.msra.mxu0 %v256
    %600 = vmatprep.subr.mxu0 0.0
    %601 = vmatpush1.msra.mxu0 %v257
    %602 = vmatprep.subr.mxu0 0.0
    %603 = vmatpush1.msra.mxu0 %v258
    %604 = vmatprep.subr.mxu0 0.0
    %605 = vmatpush1.msra.mxu0 %v259
    %606 = vmatprep.subr.mxu0 0.0
    %607 = vmatpush1.msra.mxu0 %v260
    %608 = vmatprep.subr.mxu0 0.0
    %609 = vmatpush1.msra.mxu0 %v261
    %610 = vmatprep.subr.mxu0 0.0
    %611 = vmatpush1.msra.mxu0 %v262
    %612 = vmatprep.subr.mxu0 0.0
    %613 = vmatpush1.msra.mxu0 0.0
    %614 = vmatprep.subr.mxu0 0.0
    %615 = vmatpush1.msra.mxu0 0.0
    %616 = vmatprep.subr.mxu0 0.0
    %617 = vmatpush1.msra.mxu0 0.0
    %618 = vmatprep.subr.mxu0 0.0
    %619 = vmatpush1.msra.mxu0 0.0
    %620 = vmatprep.subr.mxu0 0.0
    %621 = vmatpush1.msra.mxu0 0.0
    %622 = vmatprep.subr.mxu0 0.0
    %623 = vmatpush1.msra.mxu0 0.0
    %624 = vmatprep.subr.mxu0 0.0
    %625 = vmatpush1.msra.mxu0 0.0
    %626 = vmatprep.subr.mxu0 0.0
    %627 = vmatpush1.msra.mxu0 0.0
    %628 = vmatprep.subr.mxu0 0.0
    %629 = vmatpush1.msra.mxu0 0.0
    %630 = vmatprep.subr.mxu0 0.0
    %631 = vmatpush1.msra.mxu0 0.0
    %632 = vmatprep.subr.mxu0 0.0
    %633 = vmatpush1.msra.mxu0 0.0
    %634 = vmatprep.subr.mxu0 0.0
    %635 = vmatpush1.msra.mxu0 0.0
    %636 = vmatprep.subr.mxu0 0.0
    %637 = vmatpush1.msra.mxu0 0.0
    %638 = vmatprep.subr.mxu0 0.0
    %639 = vmatpush1.msra.mxu0 0.0
    %640 = vmatprep.subr.mxu0 0.0
    %641 = vmatpush1.msra.mxu0 0.0
    %642 = vmatprep.subr.mxu0 0.0
    %643 = vmatpush1.msra.mxu0 0.0
    %644 = vmatprep.mubr.f32.mxu0 0.0
    %645 = vmatmul.mubr.f32.gmra.mrb[0].mxu0 %v579
    %v646 = vpop.f32.mrb[0].mxu0
    %v647 = vadd.f32 0.0, %v646
    %v648 = vpop.f32.mrb[0].mxu0
    %649 = vdwg.mxu0
    %v650 = vadd.f32 %v234, %v647
    %vm651 = vcmp.gt.s32.totalorder %v263, 4
    %v652 = vmax.f32 %v650, 0.0
    %v653 = vsel %vm651, 1, 0
    %654 = vset.pattern.permute.xlu0 0
    %655 = vperm.xlu0 %654, %v653
    %v656 = vpop.permute.xlu0 %655
    %vm657 = vcmp.eq.s32.totalorder %v656, 1
    %v658 = vsel %vm657, %v652, %v579
    %659 = vmatprep.subr.mxu0 0.0
    %660 = vmatpush1.msra.mxu0 %v247
    %661 = vmatprep.subr.mxu0 0.0
    %662 = vmatpush1.msra.mxu0 %v248
    %663 = vmatprep.subr.mxu0 0.0
    %664 = vmatpush1.msra.mxu0 %v249
    %665 = vmatprep.subr.mxu0 0.0
    %666 = vmatpush1.msra.mxu0 %v250
    %667 = vmatprep.subr.mxu0 0.0
    %668 = vmatpush1.msra.mxu0 %v251
    %669 = vmatprep.subr.mxu0 0.0
    %670 = vmatpush1.msra.mxu0 %v252
    %671 = vmatprep.subr.mxu0 0.0
    %672 = vmatpush1.msra.mxu0 %v253
    %673 = vmatprep.subr.mxu0 0.0
    %674 = vmatpush1.msra.mxu0 %v254
    %675 = vmatprep.subr.mxu0 0.0
    %676 = vmatpush1.msra.mxu0 %v255
    %677 = vmatprep.subr.mxu0 0.0
    %678 = vmatpush1.msra.mxu0 %v256
    %679 = vmatprep.subr.mxu0 0.0
    %680 = vmatpush1.msra.mxu0 %v257
    %681 = vmatprep.subr.mxu0 0.0
    %682 = vmatpush1.msra.mxu0 %v258
    %683 = vmatprep.subr.mxu0 0.0
    %684 = vmatpush1.msra.mxu0 %v259
    %685 = vmatprep.subr.mxu0 0.0
    %686 = vmatpush1.msra.mxu0 %v260
    %687 = vmatprep.subr.mxu0 0.0
    %688 = vmatpush1.msra.mxu0 %v261
    %689 = vmatprep.subr.mxu0 0.0
    %690 = vmatpush1.msra.mxu0 %v262
    %691 = vmatprep.subr.mxu0 0.0
    %692 = vmatpush1.msra.mxu0 0.0
    %693 = vmatprep.subr.mxu0 0.0
    %694 = vmatpush1.msra.mxu0 0.0
    %695 = vmatprep.subr.mxu0 0.0
    %696 = vmatpush1.msra.mxu0 0.0
    %697 = vmatprep.subr.mxu0 0.0
    %698 = vmatpush1.msra.mxu0 0.0
    %699 = vmatprep.subr.mxu0 0.0
    %700 = vmatpush1.msra.mxu0 0.0
    %701 = vmatprep.subr.mxu0 0.0
    %702 = vmatpush1.msra.mxu0 0.0
    %703 = vmatprep.subr.mxu0 0.0
    %704 = vmatpush1.msra.mxu0 0.0
    %705 = vmatprep.subr.mxu0 0.0
    %706 = vmatpush1.msra.mxu0 0.0
    %707 = vmatprep.subr.mxu0 0.0
    %708 = vmatpush1.msra.mxu0 0.0
    %709 = vmatprep.subr.mxu0 0.0
    %710 = vmatpush1.msra.mxu0 0.0
    %711 = vmatprep.subr.mxu0 0.0
    %712 = vmatpush1.msra.mxu0 0.0
    %713 = vmatprep.subr.mxu0 0.0
    %714 = vmatpush1.msra.mxu0 0.0
    %715 = vmatprep.subr.mxu0 0.0
    %716 = vmatpush1.msra.mxu0 0.0
    %717 = vmatprep.subr.mxu0 0.0
    %718 = vmatpush1.msra.mxu0 0.0
    %719 = vmatprep.subr.mxu0 0.0
    %720 = vmatpush1.msra.mxu0 0.0
    %721 = vmatprep.subr.mxu0 0.0
    %722 = vmatpush1.msra.mxu0 0.0
    %723 = vmatprep.mubr.f32.mxu0 0.0
    %724 = vmatmul.mubr.f32.gmra.mrb[0].mxu0 %v658
    %v725 = vpop.f32.mrb[0].mxu0
    %v726 = vadd.f32 0.0, %v725
    %v727 = vpop.f32.mrb[0].mxu0
    %728 = vdwg.mxu0
    %v729 = vadd.f32 %v237, %v726
    %vm730 = vcmp.gt.s32.totalorder %v263, 5
    %v731 = vmax.f32 %v729, 0.0
    %v732 = vsel %vm730, 1, 0
    %733 = vset.pattern.permute.xlu0 0
    %734 = vperm.xlu0 %733, %v732
    %v735 = vpop.permute.xlu0 %734
    %vm736 = vcmp.eq.s32.totalorder %v735, 1
    %v737 = vsel %vm736, %v731, %v658
    %738 = vmatprep.subr.mxu0 0.0
    %739 = vmatpush1.msra.mxu0 %v247
    %740 = vmatprep.subr.mxu0 0.0
    %741 = vmatpush1.msra.mxu0 %v248
    %742 = vmatprep.subr.mxu0 0.0
    %743 = vmatpush1.msra.mxu0 %v249
    %744 = vmatprep.subr.mxu0 0.0
    %745 = vmatpush1.msra.mxu0 %v250
    %746 = vmatprep.subr.mxu0 0.0
    %747 = vmatpush1.msra.mxu0 %v251
    %748 = vmatprep.subr.mxu0 0.0
    %749 = vmatpush1.msra.mxu0 %v252
    %750 = vmatprep.subr.mxu0 0.0
    %751 = vmatpush1.msra.mxu0 %v253
    %752 = vmatprep.subr.mxu0 0.0
    %753 = vmatpush1.msra.mxu0 %v254
    %754 = vmatprep.subr.mxu0 0.0
    %755 = vmatpush1.msra.mxu0 %v255
    %756 = vmatprep.subr.mxu0 0.0
    %757 = vmatpush1.msra.mxu0 %v256
    %758 = vmatprep.subr.mxu0 0.0
    %759 = vmatpush1.msra.mxu0 %v257
    %760 = vmatprep.subr.mxu0 0.0
    %761 = vmatpush1.msra.mxu0 %v258
    %762 = vmatprep.subr.mxu0 0.0
    %763 = vmatpush1.msra.mxu0 %v259
    %764 = vmatprep.subr.mxu0 0.0
    %765 = vmatpush1.msra.mxu0 %v260
    %766 = vmatprep.subr.mxu0 0.0
    %767 = vmatpush1.msra.mxu0 %v261
    %768 = vmatprep.subr.mxu0 0.0
    %769 = vmatpush1.msra.mxu0 %v262
    %770 = vmatprep.subr.mxu0 0.0
    %771 = vmatpush1.msra.mxu0 0.0
    %772 = vmatprep.subr.mxu0 0.0
    %773 = vmatpush1.msra.mxu0 0.0
    %774 = vmatprep.subr.mxu0 0.0
    %775 = vmatpush1.msra.mxu0 0.0
    %776 = vmatprep.subr.mxu0 0.0
    %777 = vmatpush1.msra.mxu0 0.0
    %778 = vmatprep.subr.mxu0 0.0
    %779 = vmatpush1.msra.mxu0 0.0
    %780 = vmatprep.subr.mxu0 0.0
    %781 = vmatpush1.msra.mxu0 0.0
    %782 = vmatprep.subr.mxu0 0.0
    %783 = vmatpush1.msra.mxu0 0.0
    %784 = vmatprep.subr.mxu0 0.0
    %785 = vmatpush1.msra.mxu0 0.0
    %786 = vmatprep.subr.mxu0 0.0
    %787 = vmatpush1.msra.mxu0 0.0
    %788 = vmatprep.subr.mxu0 0.0
    %789 = vmatpush1.msra.mxu0 0.0
    %790 = vmatprep.subr.mxu0 0.0
    %791 = vmatpush1.msra.mxu0 0.0
    %792 = vmatprep.subr.mxu0 0.0
    %793 = vmatpush1.msra.mxu0 0.0
    %794 = vmatprep.subr.mxu0 0.0
    %795 = vmatpush1.msra.mxu0 0.0
    %796 = vmatprep.subr.mxu0 0.0
    %797 = vmatpush1.msra.mxu0 0.0
    %798 = vmatprep.subr.mxu0 0.0
    %799 = vmatpush1.msra.mxu0 0.0
    %800 = vmatprep.subr.mxu0 0.0
    %801 = vmatpush1.msra.mxu0 0.0
    %802 = vmatprep.mubr.f32.mxu0 0.0
    %803 = vmatmul.mubr.f32.gmra.mrb[0].mxu0 %v737
    %v804 = vpop.f32.mrb[0].mxu0
    %v805 = vadd.f32 0.0, %v804
    %v806 = vpop.f32.mrb[0].mxu0
    %807 = vdwg.mxu0
    %v808 = vadd.f32 %v242, %v805
    %vm809 = vcmp.gt.s32.totalorder %v263, 6
    %v810 = vmax.f32 %v808, 0.0
    %v811 = vsel %vm809, 1, 0
    %812 = vset.pattern.permute.xlu0 0
    %813 = vperm.xlu0 %812, %v811
    %v814 = vpop.permute.xlu0 %813
    %vm815 = vcmp.eq.s32.totalorder %v814, 1
    %v816 = vsel %vm815, %v810, %v737
    %v817 = vpack.c.bf16 %v816, %v816
    %v818 = vld [vmem:[#allocation8] sm:$0xf]
    %v819 = vld [vmem:[#allocation8 + $0x4] sm:$0xf]
    %v820 = vld [vmem:[#allocation8 + $0x8] sm:$0xf]
    %v821 = vld [vmem:[#allocation8 + $0xc] sm:$0xf]
    %v822 = vld [vmem:[#allocation8 + $0x10] sm:$0xf]
    %v823 = vld [vmem:[#allocation8 + $0x14] sm:$0xf]
    %v824 = vld [vmem:[#allocation8 + $0x18] sm:$0xf]
    %v825 = vld [vmem:[#allocation8 + $0x1c] sm:$0xf]
    %v826 = vld [vmem:[#allocation8 + $0x20] sm:$0xf]
    %v827 = vld [vmem:[#allocation8 + $0x24] sm:$0xf]
    %v828 = vld [vmem:[#allocation8 + $0x28] sm:$0xf]
    %v829 = vld [vmem:[#allocation8 + $0x2c] sm:$0xf]
    %v830 = vld [vmem:[#allocation8 + $0x30] sm:$0xf]
    %v831 = vld [vmem:[#allocation8 + $0x34] sm:$0xf]
    %v832 = vld [vmem:[#allocation8 + $0x38] sm:$0xf]
    %v833 = vld [vmem:[#allocation8 + $0x3c] sm:$0xf]
    %v834 = vld [vmem:[%s6] sm:$0x1]
    %v836 = vlaneseq
    %v837 = vshrl.u32 %v836, 7
    %v838 = vsub.s32 0, %v837
    %v839 = vrot.slane %v834, %v838
    %v857 = vunpack.c.l.b16 %v818
    %v858 = vunpack.c.l.b16 %v819
    %v859 = vunpack.c.l.b16 %v820
    %v860 = vunpack.c.l.b16 %v821
    %v861 = vunpack.c.l.b16 %v822
    %v862 = vunpack.c.l.b16 %v823
    %v863 = vunpack.c.l.b16 %v824
    %v864 = vunpack.c.l.b16 %v825
    %v865 = vunpack.c.l.b16 %v826
    %v866 = vunpack.c.l.b16 %v827
    %v867 = vunpack.c.l.b16 %v828
    %v868 = vunpack.c.l.b16 %v829
    %v869 = vunpack.c.l.b16 %v830
    %v870 = vunpack.c.l.b16 %v831
    %v871 = vunpack.c.l.b16 %v832
    %v872 = vunpack.c.l.b16 %v833
    %v873 = vpack.c.b16 %v858, %v857
    %v874 = vpack.c.b16 %v860, %v859
    %v875 = vpack.c.b16 %v862, %v861
    %v876 = vpack.c.b16 %v864, %v863
    %v877 = vpack.c.b16 %v866, %v865
    %v878 = vpack.c.b16 %v868, %v867
    %v879 = vpack.c.b16 %v870, %v869
    %v880 = vpack.c.b16 %v872, %v871
    %889 = vmatprep.subr.bf16.mxu0 0
    %890 = vmatpush1.bf16.msra.mxu0 %v873
    %891 = vmatprep.subr.bf16.mxu0 0
    %892 = vmatpush1.bf16.msra.mxu0 %v874
    %893 = vmatprep.subr.bf16.mxu0 0
    %894 = vmatpush1.bf16.msra.mxu0 %v875
    %895 = vmatprep.subr.bf16.mxu0 0
    %896 = vmatpush1.bf16.msra.mxu0 %v876
    %897 = vmatprep.subr.bf16.mxu0 0
    %898 = vmatpush1.bf16.msra.mxu0 %v877
    %899 = vmatprep.subr.bf16.mxu0 0
    %900 = vmatpush1.bf16.msra.mxu0 %v878
    %901 = vmatprep.subr.bf16.mxu0 0
    %902 = vmatpush1.bf16.msra.mxu0 %v879
    %903 = vmatprep.subr.bf16.mxu0 0
    %904 = vmatpush1.bf16.msra.mxu0 %v880
    %905 = vmatprep.subr.bf16.mxu0 0
    %906 = vmatpush1.bf16.msra.mxu0 0
    %907 = vmatprep.subr.bf16.mxu0 0
    %908 = vmatpush1.bf16.msra.mxu0 0
    %909 = vmatprep.subr.bf16.mxu0 0
    %910 = vmatpush1.bf16.msra.mxu0 0
    %911 = vmatprep.subr.bf16.mxu0 0
    %912 = vmatpush1.bf16.msra.mxu0 0
    %913 = vmatprep.subr.bf16.mxu0 0
    %914 = vmatpush1.bf16.msra.mxu0 0
    %915 = vmatprep.subr.bf16.mxu0 0
    %916 = vmatpush1.bf16.msra.mxu0 0
    %917 = vmatprep.subr.bf16.mxu0 0
    %918 = vmatpush1.bf16.msra.mxu0 0
    %919 = vmatprep.subr.bf16.mxu0 0
    %920 = vmatpush1.bf16.msra.mxu0 0
    %921 = vmatprep.mubr.bf16.mxu0 0
    %922 = vmatmul.mubr.bf16.gmra.mrb[0].mxu0 %v817
    %v923 = vpop.f32.mrb[0].mxu0
    %v924 = vadd.f32 %v839, %v923
    %v925 = vpop.f32.mrb[0].mxu0
    %v926 = vpop.f32.mrb[0].mxu0
    %v927 = vpop.f32.mrb[0].mxu0
    %928 = vdwg.mxu0
    %929 = vmax.xlane.f32.xlu0 %v924
    %v930 = vpop.xlane.xlu0 %929
    %v931 = vsub.f32 %v924, %v930
    %v932 = vmul.f32 %v931, 1.442695
    %v933 = vpow.pop %v932
    %934 = vadd.xlane.f32.xlu0 %v933
    %v935 = vpop.xlane.xlu0 %934
    %v936 = vlog2.pop %v935
    %v937 = vmul.f32 %v936, 0.6931472
    %v938 = vsub.f32 %v931, %v937
    %939 = vst [vmem:[#allocation10] sm:$0xff] %v938
    // Predicated region
    $region46: #{tpu_custom_call.1} parent=1 // pred_check
      _
    $region47: #{tpu_custom_call.1} parent=1 // pred_check_branch
      %941 = sbr.rel (0) target = $region49
    $region48: #{tpu_custom_call.1} parent=1 // pred_region
      %s943 = ssub.s32 128, 128
      %944 = vsyncadd [#allocation4], %s943
      %s946 = sshll.u32 [#allocation10], 4
      %s947 = int_to_ptr.vmem [resolvable:$true] %s946
      %949 = dma.vmem_to_hbm [thread:$0]  %s947, 128, %s7, [#allocation4]
    $region49: #{tpu_custom_call.1} parent=1 // pred_fallthru
      _
    // Predicated region
    $region50: #{tpu_custom_call.1} parent=1 // pred_check
      _
    $region51: #{tpu_custom_call.1} parent=1 // pred_check_branch
      %951 = sbr.rel (0) target = $region53
    $region52: #{tpu_custom_call.1} parent=1 // pred_region
      %952 = dma.done [#allocation4], 128
    $region53: #{tpu_custom_call.1} parent=1 // pred_fallthru
      _
    %953 = vsyncpa [#allocation3], 1
    %954 = vsyncpa [#allocation6], 1
    %955 = vsyncpa [#allocation9], 1
    %956 = vsyncpa [#allocation4], 1

</llo_original>
